<compile_context>
chip_gen: v5e
topology: v5e:2x2
jax: 0.10.0
libtpu: 0.0.40
codegen_flags: <defaults>
</compile_context>

<pallas_src>
import math
from functools import partial

import jax
import jax.numpy as jnp
from jax.experimental import pallas as pl
from jax.experimental.pallas import tpu as pltpu

_LANE = 128
_SUBLANE = 8
_MAX_TR = 512            # sublane rows per grid step -> 64K lanes, ~3.4 MiB HBM per step
_PALLAS_MIN_ROWS = 1024  # below this, dispatch + layout plumbing dominates -> plain jnp


def _multicam_kernel(in_ref, out_ref, *, az_range, el_range, cyc_range,
                     scale_lr_decay, scale_bias):
    # in_ref : (6, TR, 128) f32 planes = [scale, trans_x, trans_y, ang0, ang1, ang2]
    # out_ref: (7, TR, 128) f32 planes = [scale_pred, trans_x, trans_y, q0, q1, q2, q3]
    scale = in_ref[0]
    a0 = in_ref[3]
    a1 = in_ref[4]
    a2 = in_ref[5]

    azimuth = az_range * a0
    elev = math.pi - el_range * a1
    cyc_rot = cyc_range * a2

    # axis-angle -> quaternion (half angles). sin/cos run on the EUP slot.
    az_c = jnp.cos(0.5 * azimuth)   # q_az = [az_c, 0, az_s, 0]  (y axis)
    az_s = jnp.sin(0.5 * azimuth)
    el_c = jnp.cos(0.5 * elev)      # q_el = [el_c, el_s, 0, 0]  (x axis)
    el_s = jnp.sin(0.5 * elev)
    cr_c = jnp.cos(0.5 * cyc_rot)   # q_cr = [cr_c, 0, 0, cr_s]  (z axis)
    cr_s = jnp.sin(0.5 * cyc_rot)

    # m = q_el (x) q_az   (hamilton product; exact-zero terms dropped)
    m0 = el_c * az_c
    m1 = el_s * az_c
    m2 = el_c * az_s
    m3 = el_s * az_s

    # q = q_cr (x) m  ; all stores are dense (TR, 128) tiles -> unmasked vst.
    out_ref[0] = scale_lr_decay * scale + scale_bias
    out_ref[1] = in_ref[1]          # trans_x passthrough
    out_ref[2] = in_ref[2]          # trans_y passthrough
    out_ref[3] = cr_c * m0 - cr_s * m3
    out_ref[4] = cr_c * m1 - cr_s * m2
    out_ref[5] = cr_c * m2 + cr_s * m1
    out_ref[6] = cr_c * m3 + cr_s * m0


def _multicam_jnp(scale, trans, angles, *, az_range, el_range, cyc_range,
                  scale_lr_decay, scale_bias):
    """Plain-jnp path for small N (lets XLA fuse it into the consumer)."""
    a0 = angles[..., 0]
    a1 = angles[..., 1]
    a2 = angles[..., 2]
    azimuth = az_range * a0
    elev = math.pi - el_range * a1
    cyc_rot = cyc_range * a2

    az_c, az_s = jnp.cos(0.5 * azimuth), jnp.sin(0.5 * azimuth)
    el_c, el_s = jnp.cos(0.5 * elev), jnp.sin(0.5 * elev)
    cr_c, cr_s = jnp.cos(0.5 * cyc_rot), jnp.sin(0.5 * cyc_rot)

    m0, m1, m2, m3 = el_c * az_c, el_s * az_c, el_c * az_s, el_s * az_s
    q0 = cr_c * m0 - cr_s * m3
    q1 = cr_c * m1 - cr_s * m2
    q2 = cr_c * m2 + cr_s * m1
    q3 = cr_c * m3 + cr_s * m0

    scale_pred = scale_lr_decay * scale + scale_bias
    quat = jnp.stack([q0, q1, q2, q3], axis=-1)
    return jnp.concatenate([scale_pred, trans, quat], axis=-1).astype(jnp.float32)


def multicam_predictor(scale, trans, angles, *, scale_lr_decay, scale_bias,
                       euler_range=(30.0, 20.0, 20.0), use_pallas=None):
    """scale: (G, B, 1), trans: (G, B, 2), angles: (G, B, 3)  ->  cam: (G, B, 7)."""
    G, B, _ = scale.shape
    N = G * B
    f32 = jnp.float32

    az_range, el_range, cyc_range = [math.pi / 180.0 * float(k) for k in euler_range]
    params = dict(az_range=az_range, el_range=el_range, cyc_range=cyc_range,
                  scale_lr_decay=float(scale_lr_decay), scale_bias=float(scale_bias))

    if use_pallas is None:
        use_pallas = N >= _PALLAS_MIN_ROWS
    if not use_pallas:
        return _multicam_jnp(scale.astype(f32), trans.astype(f32),
                             angles.astype(f32), **params)

    # Pack per-row features and transpose to lane-major (6, N): layout plumbing only.
    packed = jnp.concatenate(
        [scale.reshape(N, 1), trans.reshape(N, 2), angles.reshape(N, 3)],
        axis=1).astype(f32).T                                   # (6, N)

    # Pad N to a full 128-lane column, then pick the sublane-row tile TR so the tail
    # waste is at most one small rounding (never a whole max-size tile).
    n_lane = -(-N // _LANE) * _LANE
    R = n_lane // _LANE
    if R <= _MAX_TR:
        tr = R                      # single block: block_shape == array extent is legal
        r_pad = R
    else:
        n_blocks = -(-R // _MAX_TR)
        per_block = -(-R // n_blocks)                       # ceil(R / n_blocks) <= MAX_TR
        tr = -(-per_block // _SUBLANE) * _SUBLANE           # round up to sublane multiple
        r_pad = n_blocks * tr
    n_pad = r_pad * _LANE
    if n_pad != N:
        packed = jnp.pad(packed, ((0, 0), (0, n_pad - N)))
    packed = packed.reshape(6, r_pad, _LANE)                # lane-major 3D slab

    kernel = partial(_multicam_kernel, **params)

    out = pl.pallas_call(
        kernel,
        out_shape=jax.ShapeDtypeStruct((7, r_pad, _LANE), f32),
        grid_spec=pltpu.PrefetchScalarGridSpec(
            num_scalar_prefetch=0,
            grid=(r_pad // tr,),
            in_specs=[pl.BlockSpec((6, tr, _LANE), lambda i: (0, i, 0))],
            out_specs=pl.BlockSpec((7, tr, _LANE), lambda i: (0, i, 0)),
        ),
        compiler_params=pltpu.CompilerParams(
            dimension_semantics=("parallel",),
        ),
    )(packed)

    return out.reshape(7, n_pad)[:, :N].T.reshape(G, B, 7)


def _reference(scale, trans, angles, *, scale_lr_decay, scale_bias, euler_range):
    G, B, _ = scale.shape
    N = G * B
    s = scale.reshape(N, 1)
    t = trans.reshape(N, 2)
    a = angles.reshape(N, 3)
    az_range, el_range, cyc_range = [math.pi / 180.0 * float(k) for k in euler_range]

    azimuth = az_range * a[:, 0]
    elev = math.pi - el_range * a[:, 1]
    cyc = cyc_range * a[:, 2]

    def ax_quat(ax, ang):
        qw = jnp.cos(ang / 2)
        sn = jnp.sin(ang / 2)
        return jnp.stack([qw, ax[0] * sn, ax[1] * sn, ax[2] * sn], axis=1)

    def ham(qa, qb):
        a0, a1, a2, a3 = qa[:, 0], qa[:, 1], qa[:, 2], qa[:, 3]
        b0, b1, b2, b3 = qb[:, 0], qb[:, 1], qb[:, 2], qb[:, 3]
        return jnp.stack([
            a0 * b0 - a1 * b1 - a2 * b2 - a3 * b3,
            a0 * b1 + a1 * b0 + a2 * b3 - a3 * b2,
            a0 * b2 - a1 * b3 + a2 * b0 + a3 * b1,
            a0 * b3 + a1 * b2 - a2 * b1 + a3 * b0], axis=1)

    q_az = ax_quat(jnp.array([0.0, 1.0, 0.0]), azimuth)
    q_el = ax_quat(jnp.array([1.0, 0.0, 0.0]), elev)
    q_cr = ax_quat(jnp.array([0.0, 0.0, 1.0]), cyc)
    quat = ham(q_cr, ham(q_el, q_az))

    scale_pred = scale_lr_decay * s + scale_bias
    cam = jnp.concatenate([scale_pred, t, quat], axis=1)
    return cam.reshape(G, B, 7)


if __name__ == "__main__":
    key = jax.random.PRNGKey(0)
    k1, k2, k3 = jax.random.split(key, 3)

    cfg = dict(scale_lr_decay=0.05, scale_bias=1.0)
    euler_range = (30.0, 20.0, 20.0)

    # --- production-like small shape: run the Pallas kernel explicitly ---
    G, B = 8, 2  # num_guesses, batch  -> N = 16 rows
    scale = jax.random.normal(k1, (G, B, 1), dtype=jnp.float32)
    trans = jax.random.normal(k2, (G, B, 2), dtype=jnp.float32)
    angles = jnp.tanh(jax.random.normal(k3, (G, B, 3), dtype=jnp.float32))

    out = multicam_predictor(scale, trans, angles, euler_range=euler_range,
                             use_pallas=True, **cfg)
    jax.block_until_ready(out)
    ref = _reference(scale, trans, angles, euler_range=euler_range, **cfg)
    assert out.shape == (G, B, 7)
    assert jnp.allclose(out, ref, atol=1e-5, rtol=1e-5), "pallas mismatch (small)"

    # small-N auto path (pure jnp fallback) must also match
    out_jnp = multicam_predictor(scale, trans, angles, euler_range=euler_range, **cfg)
    jax.block_until_ready(out_jnp)
    assert jnp.allclose(out_jnp, ref, atol=1e-5, rtol=1e-5), "jnp fallback mismatch"

    # --- medium shape: exercises lane padding + multi-sublane (R > 1) tiling ---
    k4, k5, k6 = jax.random.split(jax.random.PRNGKey(1), 3)
    G2, B2 = 16, 130  # N = 2080 -> R = 17 sublane rows
    scale2 = jax.random.normal(k4, (G2, B2, 1), dtype=jnp.float32)
    trans2 = jax.random.normal(k5, (G2, B2, 2), dtype=jnp.float32)
    angles2 = jnp.tanh(jax.random.normal(k6, (G2, B2, 3), dtype=jnp.float32))

    out2 = multicam_predictor(scale2, trans2, angles2, euler_range=euler_range,
                              use_pallas=True, **cfg)
    jax.block_until_ready(out2)
    ref2 = _reference(scale2, trans2, angles2, euler_range=euler_range, **cfg)
    assert out2.shape == (G2, B2, 7)
    assert jnp.allclose(out2, ref2, atol=1e-5, rtol=1e-5), "pallas mismatch (medium)"

    print("KERNEL_OK")
</pallas_src>

<mosaic_0001>
module attributes {stable_mosaic.version = 11 : i64} {
  func.func @_multicam_kernel(%arg0: i32, %arg1: memref<6x1x128xf32, #tpu.memory_space<vmem>>, %arg2: memref<7x1x128xf32, #tpu.memory_space<vmem>>) attributes {dimension_semantics = [#tpu.dimension_semantics<parallel>], iteration_bounds = array<i64: 1>, scalar_prefetch = 0 : i64, scratch_operands = 0 : i64, tpu.core_type = #tpu.core_type<tc>, window_params = [{transform_indices = @transform_0, window_bounds = array<i64: 6, 1, 128>}, {transform_indices = @transform_1, window_bounds = array<i64: 7, 1, 128>}]} {
    %c0 = arith.constant 0 : index
    %c0_0 = arith.constant 0 : index
    %c0_1 = arith.constant 0 : index
    %0 = vector.load %arg1[%c0, %c0_0, %c0_1] : memref<6x1x128xf32, #tpu.memory_space<vmem>>, vector<1x1x128xf32>
    %1 = vector.shape_cast %0 : vector<1x1x128xf32> to vector<1x128xf32>
    %c3 = arith.constant 3 : index
    %c0_2 = arith.constant 0 : index
    %c0_3 = arith.constant 0 : index
    %2 = vector.load %arg1[%c3, %c0_2, %c0_3] : memref<6x1x128xf32, #tpu.memory_space<vmem>>, vector<1x1x128xf32>
    %3 = vector.shape_cast %2 : vector<1x1x128xf32> to vector<1x128xf32>
    %c4 = arith.constant 4 : index
    %c0_4 = arith.constant 0 : index
    %c0_5 = arith.constant 0 : index
    %4 = vector.load %arg1[%c4, %c0_4, %c0_5] : memref<6x1x128xf32, #tpu.memory_space<vmem>>, vector<1x1x128xf32>
    %5 = vector.shape_cast %4 : vector<1x1x128xf32> to vector<1x128xf32>
    %c5 = arith.constant 5 : index
    %c0_6 = arith.constant 0 : index
    %c0_7 = arith.constant 0 : index
    %6 = vector.load %arg1[%c5, %c0_6, %c0_7] : memref<6x1x128xf32, #tpu.memory_space<vmem>>, vector<1x1x128xf32>
    %7 = vector.shape_cast %6 : vector<1x1x128xf32> to vector<1x128xf32>
    %cst = arith.constant 0.52359879 : f32
    %8 = vector.broadcast %cst : f32 to vector<1x128xf32>
    %9 = arith.mulf %8, %3 : vector<1x128xf32>
    %cst_8 = arith.constant 0.34906584 : f32
    %10 = vector.broadcast %cst_8 : f32 to vector<1x128xf32>
    %11 = arith.mulf %10, %5 : vector<1x128xf32>
    %cst_9 = arith.constant 3.14159274 : f32
    %12 = vector.broadcast %cst_9 : f32 to vector<1x128xf32>
    %13 = arith.subf %12, %11 : vector<1x128xf32>
    %cst_10 = arith.constant 0.34906584 : f32
    %14 = vector.broadcast %cst_10 : f32 to vector<1x128xf32>
    %15 = arith.mulf %14, %7 : vector<1x128xf32>
    %cst_11 = arith.constant 5.000000e-01 : f32
    %16 = vector.broadcast %cst_11 : f32 to vector<1x128xf32>
    %17 = arith.mulf %16, %9 : vector<1x128xf32>
    %18 = math.cos %17 : vector<1x128xf32>
    %cst_12 = arith.constant 5.000000e-01 : f32
    %19 = vector.broadcast %cst_12 : f32 to vector<1x128xf32>
    %20 = arith.mulf %19, %9 : vector<1x128xf32>
    %21 = math.sin %20 : vector<1x128xf32>
    %cst_13 = arith.constant 5.000000e-01 : f32
    %22 = vector.broadcast %cst_13 : f32 to vector<1x128xf32>
    %23 = arith.mulf %22, %13 : vector<1x128xf32>
    %24 = math.cos %23 : vector<1x128xf32>
    %cst_14 = arith.constant 5.000000e-01 : f32
    %25 = vector.broadcast %cst_14 : f32 to vector<1x128xf32>
    %26 = arith.mulf %25, %13 : vector<1x128xf32>
    %27 = math.sin %26 : vector<1x128xf32>
    %cst_15 = arith.constant 5.000000e-01 : f32
    %28 = vector.broadcast %cst_15 : f32 to vector<1x128xf32>
    %29 = arith.mulf %28, %15 : vector<1x128xf32>
    %30 = math.cos %29 : vector<1x128xf32>
    %cst_16 = arith.constant 5.000000e-01 : f32
    %31 = vector.broadcast %cst_16 : f32 to vector<1x128xf32>
    %32 = arith.mulf %31, %15 : vector<1x128xf32>
    %33 = math.sin %32 : vector<1x128xf32>
    %34 = arith.mulf %24, %18 : vector<1x128xf32>
    %35 = arith.mulf %27, %18 : vector<1x128xf32>
    %36 = arith.mulf %24, %21 : vector<1x128xf32>
    %37 = arith.mulf %27, %21 : vector<1x128xf32>
    %cst_17 = arith.constant 5.000000e-02 : f32
    %38 = vector.broadcast %cst_17 : f32 to vector<1x128xf32>
    %39 = arith.mulf %38, %1 : vector<1x128xf32>
    %cst_18 = arith.constant 1.000000e+00 : f32
    %40 = vector.broadcast %cst_18 : f32 to vector<1x128xf32>
    %41 = arith.addf %39, %40 : vector<1x128xf32>
    %c0_19 = arith.constant 0 : index
    %c0_20 = arith.constant 0 : index
    %c0_21 = arith.constant 0 : index
    %42 = vector.load %arg2[%c0_19, %c0_20, %c0_21] : memref<7x1x128xf32, #tpu.memory_space<vmem>>, vector<1x1x128xf32>
    %43 = vector.shape_cast %42 : vector<1x1x128xf32> to vector<1x128xf32>
    %44 = vector.shape_cast %41 : vector<1x128xf32> to vector<1x1x128xf32>
    tpu.vector_store %arg2[%c0_19, %c0_20, %c0_21], %44 {strides = array<i32>} : memref<7x1x128xf32, #tpu.memory_space<vmem>>, vector<1x1x128xf32>,
    %c1 = arith.constant 1 : index
    %c0_22 = arith.constant 0 : index
    %c0_23 = arith.constant 0 : index
    %45 = vector.load %arg1[%c1, %c0_22, %c0_23] : memref<6x1x128xf32, #tpu.memory_space<vmem>>, vector<1x1x128xf32>
    %46 = vector.shape_cast %45 : vector<1x1x128xf32> to vector<1x128xf32>
    %c1_24 = arith.constant 1 : index
    %c0_25 = arith.constant 0 : index
    %c0_26 = arith.constant 0 : index
    %47 = vector.load %arg2[%c1_24, %c0_25, %c0_26] : memref<7x1x128xf32, #tpu.memory_space<vmem>>, vector<1x1x128xf32>
    %48 = vector.shape_cast %47 : vector<1x1x128xf32> to vector<1x128xf32>
    %49 = vector.shape_cast %46 : vector<1x128xf32> to vector<1x1x128xf32>
    tpu.vector_store %arg2[%c1_24, %c0_25, %c0_26], %49 {strides = array<i32>} : memref<7x1x128xf32, #tpu.memory_space<vmem>>, vector<1x1x128xf32>,
    %c2 = arith.constant 2 : index
    %c0_27 = arith.constant 0 : index
    %c0_28 = arith.constant 0 : index
    %50 = vector.load %arg1[%c2, %c0_27, %c0_28] : memref<6x1x128xf32, #tpu.memory_space<vmem>>, vector<1x1x128xf32>
    %51 = vector.shape_cast %50 : vector<1x1x128xf32> to vector<1x128xf32>
    %c2_29 = arith.constant 2 : index
    %c0_30 = arith.constant 0 : index
    %c0_31 = arith.constant 0 : index
    %52 = vector.load %arg2[%c2_29, %c0_30, %c0_31] : memref<7x1x128xf32, #tpu.memory_space<vmem>>, vector<1x1x128xf32>
    %53 = vector.shape_cast %52 : vector<1x1x128xf32> to vector<1x128xf32>
    %54 = vector.shape_cast %51 : vector<1x128xf32> to vector<1x1x128xf32>
    tpu.vector_store %arg2[%c2_29, %c0_30, %c0_31], %54 {strides = array<i32>} : memref<7x1x128xf32, #tpu.memory_space<vmem>>, vector<1x1x128xf32>,
    %55 = arith.mulf %30, %34 : vector<1x128xf32>
    %56 = arith.mulf %33, %37 : vector<1x128xf32>
    %57 = arith.subf %55, %56 : vector<1x128xf32>
    %c3_32 = arith.constant 3 : index
    %c0_33 = arith.constant 0 : index
    %c0_34 = arith.constant 0 : index
    %58 = vector.load %arg2[%c3_32, %c0_33, %c0_34] : memref<7x1x128xf32, #tpu.memory_space<vmem>>, vector<1x1x128xf32>
    %59 = vector.shape_cast %58 : vector<1x1x128xf32> to vector<1x128xf32>
    %60 = vector.shape_cast %57 : vector<1x128xf32> to vector<1x1x128xf32>
    tpu.vector_store %arg2[%c3_32, %c0_33, %c0_34], %60 {strides = array<i32>} : memref<7x1x128xf32, #tpu.memory_space<vmem>>, vector<1x1x128xf32>,
    %61 = arith.mulf %30, %35 : vector<1x128xf32>
    %62 = arith.mulf %33, %36 : vector<1x128xf32>
    %63 = arith.subf %61, %62 : vector<1x128xf32>
    %c4_35 = arith.constant 4 : index
    %c0_36 = arith.constant 0 : index
    %c0_37 = arith.constant 0 : index
    %64 = vector.load %arg2[%c4_35, %c0_36, %c0_37] : memref<7x1x128xf32, #tpu.memory_space<vmem>>, vector<1x1x128xf32>
    %65 = vector.shape_cast %64 : vector<1x1x128xf32> to vector<1x128xf32>
    %66 = vector.shape_cast %63 : vector<1x128xf32> to vector<1x1x128xf32>
    tpu.vector_store %arg2[%c4_35, %c0_36, %c0_37], %66 {strides = array<i32>} : memref<7x1x128xf32, #tpu.memory_space<vmem>>, vector<1x1x128xf32>,
    %67 = arith.mulf %30, %36 : vector<1x128xf32>
    %68 = arith.mulf %33, %35 : vector<1x128xf32>
    %69 = arith.addf %67, %68 : vector<1x128xf32>
    %c5_38 = arith.constant 5 : index
    %c0_39 = arith.constant 0 : index
    %c0_40 = arith.constant 0 : index
    %70 = vector.load %arg2[%c5_38, %c0_39, %c0_40] : memref<7x1x128xf32, #tpu.memory_space<vmem>>, vector<1x1x128xf32>
    %71 = vector.shape_cast %70 : vector<1x1x128xf32> to vector<1x128xf32>
    %72 = vector.shape_cast %69 : vector<1x128xf32> to vector<1x1x128xf32>
    tpu.vector_store %arg2[%c5_38, %c0_39, %c0_40], %72 {strides = array<i32>} : memref<7x1x128xf32, #tpu.memory_space<vmem>>, vector<1x1x128xf32>,
    %73 = arith.mulf %30, %37 : vector<1x128xf32>
    %74 = arith.mulf %33, %34 : vector<1x128xf32>
    %75 = arith.addf %73, %74 : vector<1x128xf32>
    %c6 = arith.constant 6 : index
    %c0_41 = arith.constant 0 : index
    %c0_42 = arith.constant 0 : index
    %76 = vector.load %arg2[%c6, %c0_41, %c0_42] : memref<7x1x128xf32, #tpu.memory_space<vmem>>, vector<1x1x128xf32>
    %77 = vector.shape_cast %76 : vector<1x1x128xf32> to vector<1x128xf32>
    %78 = vector.shape_cast %75 : vector<1x128xf32> to vector<1x1x128xf32>
    tpu.vector_store %arg2[%c6, %c0_41, %c0_42], %78 {strides = array<i32>} : memref<7x1x128xf32, #tpu.memory_space<vmem>>, vector<1x1x128xf32>,
    return
  }
  func.func @transform_0(%arg0: i32) -> (i32, i32, i32) {
    %c0_i32 = arith.constant 0 : i32
    %c0_i32_0 = arith.constant 0 : i32
    %c0_i32_1 = arith.constant 0 : i32
    return %c0_i32, %arg0, %c0_i32_0 : i32, i32, i32
  }
  func.func @transform_1(%arg0: i32) -> (i32, i32, i32) {
    %c0_i32 = arith.constant 0 : i32
    %c0_i32_0 = arith.constant 0 : i32
    %c0_i32_1 = arith.constant 0 : i32
    return %c0_i32, %arg0, %c0_i32_0 : i32, i32, i32
  }
}

</mosaic_0001>

<llo_original>
// kernel: tpu_custom_call.1
$region0: #{tpu_custom_call.1}
  #allocation0 [shape = 'u32[]', space=smem, size = 0x4, offset = 0x4, fixed_abs, tag = 'smem constant byte address 0x4 - core index']
  #allocation1 [shape = 'u32[72,128]{1,0:T(1,128)}', space=vmem, size = 0x9000, scoped, tag = 'internal scratch']
  %s0 = inlined_call_operand.hbm [shape: f32[6,1,128], index: 0, kind: input, shape index: {}]
  %s1 = inlined_call_operand.hbm [shape: f32[7,1,128], index: 1, kind: output, shape index: {}]
  %s2 = sld [smem:[#allocation0]]
  $region18: #{tpu_custom_call.1} parent=0
    _
  %s4 = ssub.s32 1, %s2
  %s5 = scalar_select 0, %s4, %s2
  $region1: #{tpu_custom_call.1} parent=0
    #allocation2 [shape = 'u8[3072]{0}', space=vmem, size = 0xc00, scoped, tag = 'input window, operand 0, single buffered']
    #allocation3 [shape = 's32[1]{0}', space=sflag, size = 0x4, scoped, tag = 'scoped memory for tpu_custom_call.1']
    #allocation4 [shape = 's32[1]{0}', space=sflag, size = 0x4, scoped, tag = 'scoped memory for tpu_custom_call.1']
    #allocation5 [shape = 'u8[3584]{0}', space=vmem, size = 0x1000, scoped, tag = 'output window, operand 0, single buffered']
    %6 = vsyncpa [#allocation3], 0
    %7 = vsyncpa [#allocation4], 0
    // Predicated region
    $region2: #{tpu_custom_call.1} parent=1 // pred_check
      _
    $region3: #{tpu_custom_call.1} parent=1 // pred_check_branch
      %9 = sbr.rel (0) target = $region5
    $region4: #{tpu_custom_call.1} parent=1 // pred_region
      %11 = vsyncadd [#allocation3], 0
      %s12 = sshll.u32 %s0, 4
      %s13 = int_to_ptr.hbm [resolvable:$true] %s12
      %s14 = sshll.u32 [#allocation2], 4
      %s15 = int_to_ptr.vmem [resolvable:$true] %s14
      %20 = dma.hbm_to_vmem [thread:$0]  %s13, 96, %s15, [#allocation3], 16, 16, 1
    $region5: #{tpu_custom_call.1} parent=1 // pred_fallthru
      _
    // Predicated region
    $region6: #{tpu_custom_call.1} parent=1 // pred_check
      _
    $region7: #{tpu_custom_call.1} parent=1 // pred_check_branch
      %22 = sbr.rel (0) target = $region9
    $region8: #{tpu_custom_call.1} parent=1 // pred_region
      %24 = dma.done [#allocation3], 96
    $region9: #{tpu_custom_call.1} parent=1 // pred_fallthru
      _
    %v25 = vld [vmem:[#allocation2] sm:$0x1]
    %s26 = scalar_lea.vmem [#allocation2], 3
    %v27 = vld [vmem:[%s26] sm:$0x1]
    %s28 = scalar_lea.vmem [#allocation2], 4
    %v29 = vld [vmem:[%s28] sm:$0x1]
    %s30 = scalar_lea.vmem [#allocation2], 5
    %v31 = vld [vmem:[%s30] sm:$0x1]
    %v32 = vmul.f32 %v27, 0.5235988
    %v33 = vmul.f32 %v29, 0.34906584
    %v34 = vsub.f32 3.1415927, %v33
    %v35 = vmul.f32 %v31, 0.34906584
    %v36 = vmul.f32 %v32, 0.5
    %v37 = vand.u32 2147483647, %v36
    %vm38 = vcmp.le.f32.partialorder %v37, 0.7853982
    %vm39 = vcmp.lt.s32.totalorder %v36, 0
    %v40 = vand.u32 %v36, 2139095040
    %v41 = vshrl.u32 %v40, 23
    %v42 = vsub.s32 %v41, 127
    %v43 = vand.u32 2147483647, %v36
    %v44 = vand.u32 %v43, 8388607
    %v45 = vor.u32 %v44, 8388608
    %v46 = vsub.s32 0, %v45
    %v47 = vadd.s32 %v42, 1
    %vm48 = vcmp.gt.s32.totalorder %v47, 0
    %v49 = vsel %vm48, %v47, 0
    %v50 = vshrl.u32 %v49, 5
    %v51 = vand.u32 %v49, 31
    %v52 = vsub.s32 32, %v51
    %v53 = vshrl.u32 683565275, %v52
    %v54 = vshll.u32 683565275, %v51
    %v55 = vshrl.u32 2475754826, %v52
    %v56 = vor.u32 %v54, %v55
    %v57 = vshll.u32 2475754826, %v51
    %v58 = vshrl.u32 2131351028, %v52
    %v59 = vor.u32 %v57, %v58
    %v60 = vshll.u32 2131351028, %v51
    %v61 = vshrl.u32 2102212464, %v52
    %v62 = vor.u32 %v60, %v61
    %v63 = vshll.u32 2102212464, %v51
    %v64 = vshrl.u32 920167782, %v52
    %v65 = vor.u32 %v63, %v64
    %v66 = vshll.u32 920167782, %v51
    %v67 = vshrl.u32 1326507024, %v52
    %v68 = vor.u32 %v66, %v67
    %vm69 = vcmp.lt.s32.totalorder %v50, 1
    %vm70 = vcmp.lt.s32.totalorder %v50, 2
    %vm71 = vcmp.lt.s32.totalorder %v50, 3
    %vm72 = vcmp.lt.s32.totalorder %v50, 4
    %v73 = vsel %vm69, %v53, %v56
    %v74 = vsel %vm72, %v62, 2102212464
    %v75 = vsel %vm71, %v59, %v74
    %v76 = vsel %vm70, %v73, %v75
    %v77 = vsel %vm69, %v56, %v59
    %v78 = vsel %vm72, %v65, 920167782
    %v79 = vsel %vm71, %v62, %v78
    %v80 = vsel %vm70, %v77, %v79
    %v81 = vsel %vm69, %v59, %v62
    %v82 = vsel %vm72, %v68, 1326507024
    %v83 = vsel %vm71, %v65, %v82
    %v84 = vsel %vm70, %v81, %v83
    %v85 = vshll.u32 %v45, 8
    %v86 = vand.u32 %v85, 65535
    %v87 = vshrl.u32 %v85, 16
    %v88 = vand.u32 %v84, 65535
    %v89 = vshrl.u32 %v84, 16
    %v90 = vmul.u32 %v86, %v88
    %v91 = vmul.u32 %v86, %v89
    %v92 = vmul.u32 %v87, %v88
    %v93 = vmul.u32 %v87, %v89
    %v94 = vshll.u32 %v91, 16
    %v95 = vshrl.u32 %v91, 16
    %v96 = vshll.u32 %v92, 16
    %v97 = vshrl.u32 %v92, 16
    %vm98 = vc.u32 %v90, %v94
    %v99 = vsel %vm98, 1, 0
    %v100 = vadd.s32 %v90, %v94
    %v101 = vadd.s32 %v93, %v99
    %vm102 = vc.u32 %v100, %v96
    %v103 = vsel %vm102, 1, 0
    %v104 = vadd.s32 %v100, %v96
    %v105 = vadd.s32 %v101, %v103
    %v106 = vadd.s32 %v105, %v95
    %v107 = vadd.s32 %v106, %v97
    %v108 = vand.u32 %v85, 65535
    %v109 = vshrl.u32 %v85, 16
    %v110 = vand.u32 %v80, 65535
    %v111 = vshrl.u32 %v80, 16
    %v112 = vmul.u32 %v108, %v110
    %v113 = vmul.u32 %v108, %v111
    %v114 = vmul.u32 %v109, %v110
    %v115 = vmul.u32 %v109, %v111
    %v116 = vshll.u32 %v113, 16
    %v117 = vshrl.u32 %v113, 16
    %v118 = vshll.u32 %v114, 16
    %v119 = vshrl.u32 %v114, 16
    %vm120 = vc.u32 %v112, %v116
    %v121 = vsel %vm120, 1, 0
    %v122 = vadd.s32 %v112, %v116
    %v123 = vadd.s32 %v115, %v121
    %vm124 = vc.u32 %v122, %v118
    %v125 = vsel %vm124, 1, 0
    %v126 = vadd.s32 %v122, %v118
    %v127 = vadd.s32 %v123, %v125
    %v128 = vadd.s32 %v127, %v117
    %v129 = vadd.s32 %v128, %v119
    %v130 = vmul.u32 %v85, %v76
    %v131 = vadd.s32 %v107, %v126
    %vm132 = vc.u32 %v107, %v126
    %v133 = vadd.s32 %v129, 1
    %v134 = vsel %vm132, %v133, %v129
    %v135 = vadd.s32 %v130, %v134
    %v136 = vadd.s32 %v135, 536870912
    %v137 = vshrl.u32 %v136, 30
    %v138 = vshll.u32 %v137, 30
    %v139 = vsub.s32 %v135, %v138
    %vm140 = vcmp.lt.s32.totalorder %v139, 0
    %v141 = vsub.s32 0, %v139
    %v142 = vsel %vm140, %v141, %v139
    %v143 = vclz %v142
    %v144 = vsub.s32 %v143, 2
    %vm145 = vcmp.gt.s32.totalorder 0, %v144
    %v146 = vsel %vm145, 0, %v144
    %v147 = vsub.s32 32, %v146
    %v148 = vshll.u32 %v139, %v146
    %v149 = vshrl.u32 %v131, %v147
    %v150 = vor.u32 %v148, %v149
    %v151 = vsub.s32 4294967266, %v146
    %v152 = vadd.s32 %v151, 127
    %v153 = vshll.u32 %v152, 23
    %v154 = vor.u32 4788187, %v153
    %v155 = vand.u32 2147483647, %v154
    %v157 = vcvt.s32.f32 %v150
    %v158 = vmul.f32 %v157, %v155
    %v159 = vxor.u32 %v158, 2147483648
    %v160 = vsel %vm39, %v159, %v158
    %v161 = vsub.s32 4, %v137
    %v162 = vsel %vm39, %v161, %v137
    %v163 = vsel %vm38, %v36, %v160
    %v164 = vsel %vm38, 0, %v162
    %v165 = vmul.f32 %v163, %v163
    %v166 = vmul.f32 %v165, -0.001358992
    %v167 = vadd.f32 %v166, 0.041655596
    %v168 = vmul.f32 %v165, %v167
    %v169 = vadd.f32 %v168, -0.4999988
    %v170 = vmul.f32 %v165, %v169
    %v171 = vadd.f32 1.0, %v170
    %v172 = vmul.f32 %v163, %v163
    %v173 = vmul.f32 %v172, -0.00019511016
    %v174 = vadd.f32 %v173, 0.008332121
    %v175 = vmul.f32 %v172, %v174
    %v176 = vadd.f32 %v175, -0.16666654
    %v177 = vmul.f32 %v172, %v176
    %v178 = vadd.f32 %v177, 1.0
    %v179 = vmul.f32 %v178, %v163
    %vm180 = vweird.f32 %v36
    %v181 = vand.u32 %v164, 3
    %vm182 = vcmp.lt.s32.totalorder %v181, 2
    %vm183 = vcmp.eq.s32.totalorder %v181, 0
    %v184 = vxor.u32 %v179, 2147483648
    %v185 = vsel %vm183, %v171, %v184
    %vm186 = vcmp.eq.s32.totalorder %v181, 2
    %v187 = vxor.u32 %v171, 2147483648
    %v188 = vsel %vm186, %v187, %v179
    %v189 = vsel %vm182, %v185, %v188
    %v190 = vsel %vm180, nan, %v189
    %v191 = vand.u32 2147483647, %v36
    %vm192 = vcmp.le.f32.partialorder %v191, 0.7853982
    %vm193 = vcmp.lt.s32.totalorder %v36, 0
    %v194 = vand.u32 %v36, 2139095040
    %v195 = vshrl.u32 %v194, 23
    %v196 = vsub.s32 %v195, 127
    %v197 = vand.u32 2147483647, %v36
    %v198 = vand.u32 %v197, 8388607
    %v199 = vor.u32 %v198, 8388608
    %v200 = vsub.s32 0, %v199
    %v201 = vadd.s32 %v196, 1
    %vm202 = vcmp.gt.s32.totalorder %v201, 0
    %v203 = vsel %vm202, %v201, 0
    %v204 = vshrl.u32 %v203, 5
    %v205 = vand.u32 %v203, 31
    %v206 = vsub.s32 32, %v205
    %v207 = vshrl.u32 683565275, %v206
    %v208 = vshll.u32 683565275, %v205
    %v209 = vshrl.u32 2475754826, %v206
    %v210 = vor.u32 %v208, %v209
    %v211 = vshll.u32 2475754826, %v205
    %v212 = vshrl.u32 2131351028, %v206
    %v213 = vor.u32 %v211, %v212
    %v214 = vshll.u32 2131351028, %v205
    %v215 = vshrl.u32 2102212464, %v206
    %v216 = vor.u32 %v214, %v215
    %v217 = vshll.u32 2102212464, %v205
    %v218 = vshrl.u32 920167782, %v206
    %v219 = vor.u32 %v217, %v218
    %v220 = vshll.u32 920167782, %v205
    %v221 = vshrl.u32 1326507024, %v206
    %v222 = vor.u32 %v220, %v221
    %vm223 = vcmp.lt.s32.totalorder %v204, 1
    %vm224 = vcmp.lt.s32.totalorder %v204, 2
    %vm225 = vcmp.lt.s32.totalorder %v204, 3
    %vm226 = vcmp.lt.s32.totalorder %v204, 4
    %v227 = vsel %vm223, %v207, %v210
    %v228 = vsel %vm226, %v216, 2102212464
    %v229 = vsel %vm225, %v213, %v228
    %v230 = vsel %vm224, %v227, %v229
    %v231 = vsel %vm223, %v210, %v213
    %v232 = vsel %vm226, %v219, 920167782
    %v233 = vsel %vm225, %v216, %v232
    %v234 = vsel %vm224, %v231, %v233
    %v235 = vsel %vm223, %v213, %v216
    %v236 = vsel %vm226, %v222, 1326507024
    %v237 = vsel %vm225, %v219, %v236
    %v238 = vsel %vm224, %v235, %v237
    %v239 = vshll.u32 %v199, 8
    %v240 = vand.u32 %v239, 65535
    %v241 = vshrl.u32 %v239, 16
    %v242 = vand.u32 %v238, 65535
    %v243 = vshrl.u32 %v238, 16
    %v244 = vmul.u32 %v240, %v242
    %v245 = vmul.u32 %v240, %v243
    %v246 = vmul.u32 %v241, %v242
    %v247 = vmul.u32 %v241, %v243
    %v248 = vshll.u32 %v245, 16
    %v249 = vshrl.u32 %v245, 16
    %v250 = vshll.u32 %v246, 16
    %v251 = vshrl.u32 %v246, 16
    %vm252 = vc.u32 %v244, %v248
    %v253 = vsel %vm252, 1, 0
    %v254 = vadd.s32 %v244, %v248
    %v255 = vadd.s32 %v247, %v253
    %vm256 = vc.u32 %v254, %v250
    %v257 = vsel %vm256, 1, 0
    %v258 = vadd.s32 %v254, %v250
    %v259 = vadd.s32 %v255, %v257
    %v260 = vadd.s32 %v259, %v249
    %v261 = vadd.s32 %v260, %v251
    %v262 = vand.u32 %v239, 65535
    %v263 = vshrl.u32 %v239, 16
    %v264 = vand.u32 %v234, 65535
    %v265 = vshrl.u32 %v234, 16
    %v266 = vmul.u32 %v262, %v264
    %v267 = vmul.u32 %v262, %v265
    %v268 = vmul.u32 %v263, %v264
    %v269 = vmul.u32 %v263, %v265
    %v270 = vshll.u32 %v267, 16
    %v271 = vshrl.u32 %v267, 16
    %v272 = vshll.u32 %v268, 16
    %v273 = vshrl.u32 %v268, 16
    %vm274 = vc.u32 %v266, %v270
    %v275 = vsel %vm274, 1, 0
    %v276 = vadd.s32 %v266, %v270
    %v277 = vadd.s32 %v269, %v275
    %vm278 = vc.u32 %v276, %v272
    %v279 = vsel %vm278, 1, 0
    %v280 = vadd.s32 %v276, %v272
    %v281 = vadd.s32 %v277, %v279
    %v282 = vadd.s32 %v281, %v271
    %v283 = vadd.s32 %v282, %v273
    %v284 = vmul.u32 %v239, %v230
    %v285 = vadd.s32 %v261, %v280
    %vm286 = vc.u32 %v261, %v280
    %v287 = vadd.s32 %v283, 1
    %v288 = vsel %vm286, %v287, %v283
    %v289 = vadd.s32 %v284, %v288
    %v290 = vadd.s32 %v289, 536870912
    %v291 = vshrl.u32 %v290, 30
    %v292 = vshll.u32 %v291, 30
    %v293 = vsub.s32 %v289, %v292
    %vm294 = vcmp.lt.s32.totalorder %v293, 0
    %v295 = vsub.s32 0, %v293
    %v296 = vsel %vm294, %v295, %v293
    %v297 = vclz %v296
    %v298 = vsub.s32 %v297, 2
    %vm299 = vcmp.gt.s32.totalorder 0, %v298
    %v300 = vsel %vm299, 0, %v298
    %v301 = vsub.s32 32, %v300
    %v302 = vshll.u32 %v293, %v300
    %v303 = vshrl.u32 %v285, %v301
    %v304 = vor.u32 %v302, %v303
    %v305 = vsub.s32 4294967266, %v300
    %v306 = vadd.s32 %v305, 127
    %v307 = vshll.u32 %v306, 23
    %v308 = vor.u32 4788187, %v307
    %v309 = vand.u32 2147483647, %v308
    %v311 = vcvt.s32.f32 %v304
    %v312 = vmul.f32 %v311, %v309
    %v313 = vxor.u32 %v312, 2147483648
    %v314 = vsel %vm193, %v313, %v312
    %v315 = vsub.s32 4, %v291
    %v316 = vsel %vm193, %v315, %v291
    %v317 = vsel %vm192, %v36, %v314
    %v318 = vsel %vm192, 0, %v316
    %v319 = vmul.f32 %v317, %v317
    %v320 = vmul.f32 %v319, -0.001358992
    %v321 = vadd.f32 %v320, 0.041655596
    %v322 = vmul.f32 %v319, %v321
    %v323 = vadd.f32 %v322, -0.4999988
    %v324 = vmul.f32 %v319, %v323
    %v325 = vadd.f32 1.0, %v324
    %v326 = vmul.f32 %v317, %v317
    %v327 = vmul.f32 %v326, -0.00019511016
    %v328 = vadd.f32 %v327, 0.008332121
    %v329 = vmul.f32 %v326, %v328
    %v330 = vadd.f32 %v329, -0.16666654
    %v331 = vmul.f32 %v326, %v330
    %v332 = vadd.f32 %v331, 1.0
    %v333 = vmul.f32 %v332, %v317
    %vm334 = vweird.f32 %v36
    %v335 = vadd.s32 %v318, 3
    %v336 = vand.u32 %v335, 3
    %vm337 = vcmp.lt.s32.totalorder %v336, 2
    %vm338 = vcmp.eq.s32.totalorder %v336, 0
    %v339 = vxor.u32 %v333, 2147483648
    %v340 = vsel %vm338, %v325, %v339
    %vm341 = vcmp.eq.s32.totalorder %v336, 2
    %v342 = vxor.u32 %v325, 2147483648
    %v343 = vsel %vm341, %v342, %v333
    %v344 = vsel %vm337, %v340, %v343
    %v345 = vsel %vm334, nan, %v344
    %v346 = vmul.f32 %v34, 0.5
    %v347 = vand.u32 2147483647, %v346
    %vm348 = vcmp.le.f32.partialorder %v347, 0.7853982
    %vm349 = vcmp.lt.s32.totalorder %v346, 0
    %v350 = vand.u32 %v346, 2139095040
    %v351 = vshrl.u32 %v350, 23
    %v352 = vsub.s32 %v351, 127
    %v353 = vand.u32 2147483647, %v346
    %v354 = vand.u32 %v353, 8388607
    %v355 = vor.u32 %v354, 8388608
    %v356 = vsub.s32 0, %v355
    %v357 = vadd.s32 %v352, 1
    %vm358 = vcmp.gt.s32.totalorder %v357, 0
    %v359 = vsel %vm358, %v357, 0
    %v360 = vshrl.u32 %v359, 5
    %v361 = vand.u32 %v359, 31
    %v362 = vsub.s32 32, %v361
    %v363 = vshrl.u32 683565275, %v362
    %v364 = vshll.u32 683565275, %v361
    %v365 = vshrl.u32 2475754826, %v362
    %v366 = vor.u32 %v364, %v365
    %v367 = vshll.u32 2475754826, %v361
    %v368 = vshrl.u32 2131351028, %v362
    %v369 = vor.u32 %v367, %v368
    %v370 = vshll.u32 2131351028, %v361
    %v371 = vshrl.u32 2102212464, %v362
    %v372 = vor.u32 %v370, %v371
    %v373 = vshll.u32 2102212464, %v361
    %v374 = vshrl.u32 920167782, %v362
    %v375 = vor.u32 %v373, %v374
    %v376 = vshll.u32 920167782, %v361
    %v377 = vshrl.u32 1326507024, %v362
    %v378 = vor.u32 %v376, %v377
    %vm379 = vcmp.lt.s32.totalorder %v360, 1
    %vm380 = vcmp.lt.s32.totalorder %v360, 2
    %vm381 = vcmp.lt.s32.totalorder %v360, 3
    %vm382 = vcmp.lt.s32.totalorder %v360, 4
    %v383 = vsel %vm379, %v363, %v366
    %v384 = vsel %vm382, %v372, 2102212464
    %v385 = vsel %vm381, %v369, %v384
    %v386 = vsel %vm380, %v383, %v385
    %v387 = vsel %vm379, %v366, %v369
    %v388 = vsel %vm382, %v375, 920167782
    %v389 = vsel %vm381, %v372, %v388
    %v390 = vsel %vm380, %v387, %v389
    %v391 = vsel %vm379, %v369, %v372
    %v392 = vsel %vm382, %v378, 1326507024
    %v393 = vsel %vm381, %v375, %v392
    %v394 = vsel %vm380, %v391, %v393
    %v395 = vshll.u32 %v355, 8
    %v396 = vand.u32 %v395, 65535
    %v397 = vshrl.u32 %v395, 16
    %v398 = vand.u32 %v394, 65535
    %v399 = vshrl.u32 %v394, 16
    %v400 = vmul.u32 %v396, %v398
    %v401 = vmul.u32 %v396, %v399
    %v402 = vmul.u32 %v397, %v398
    %v403 = vmul.u32 %v397, %v399
    %v404 = vshll.u32 %v401, 16
    %v405 = vshrl.u32 %v401, 16
    %v406 = vshll.u32 %v402, 16
    %v407 = vshrl.u32 %v402, 16
    %vm408 = vc.u32 %v400, %v404
    %v409 = vsel %vm408, 1, 0
    %v410 = vadd.s32 %v400, %v404
    %v411 = vadd.s32 %v403, %v409
    %vm412 = vc.u32 %v410, %v406
    %v413 = vsel %vm412, 1, 0
    %v414 = vadd.s32 %v410, %v406
    %v415 = vadd.s32 %v411, %v413
    %v416 = vadd.s32 %v415, %v405
    %v417 = vadd.s32 %v416, %v407
    %v418 = vand.u32 %v395, 65535
    %v419 = vshrl.u32 %v395, 16
    %v420 = vand.u32 %v390, 65535
    %v421 = vshrl.u32 %v390, 16
    %v422 = vmul.u32 %v418, %v420
    %v423 = vmul.u32 %v418, %v421
    %v424 = vmul.u32 %v419, %v420
    %v425 = vmul.u32 %v419, %v421
    %v426 = vshll.u32 %v423, 16
    %v427 = vshrl.u32 %v423, 16
    %v428 = vshll.u32 %v424, 16
    %v429 = vshrl.u32 %v424, 16
    %vm430 = vc.u32 %v422, %v426
    %v431 = vsel %vm430, 1, 0
    %v432 = vadd.s32 %v422, %v426
    %v433 = vadd.s32 %v425, %v431
    %vm434 = vc.u32 %v432, %v428
    %v435 = vsel %vm434, 1, 0
    %v436 = vadd.s32 %v432, %v428
    %v437 = vadd.s32 %v433, %v435
    %v438 = vadd.s32 %v437, %v427
    %v439 = vadd.s32 %v438, %v429
    %v440 = vmul.u32 %v395, %v386
    %v441 = vadd.s32 %v417, %v436
    %vm442 = vc.u32 %v417, %v436
    %v443 = vadd.s32 %v439, 1
    %v444 = vsel %vm442, %v443, %v439
    %v445 = vadd.s32 %v440, %v444
    %v446 = vadd.s32 %v445, 536870912
    %v447 = vshrl.u32 %v446, 30
    %v448 = vshll.u32 %v447, 30
    %v449 = vsub.s32 %v445, %v448
    %vm450 = vcmp.lt.s32.totalorder %v449, 0
    %v451 = vsub.s32 0, %v449
    %v452 = vsel %vm450, %v451, %v449
    %v453 = vclz %v452
    %v454 = vsub.s32 %v453, 2
    %vm455 = vcmp.gt.s32.totalorder 0, %v454
    %v456 = vsel %vm455, 0, %v454
    %v457 = vsub.s32 32, %v456
    %v458 = vshll.u32 %v449, %v456
    %v459 = vshrl.u32 %v441, %v457
    %v460 = vor.u32 %v458, %v459
    %v461 = vsub.s32 4294967266, %v456
    %v462 = vadd.s32 %v461, 127
    %v463 = vshll.u32 %v462, 23
    %v464 = vor.u32 4788187, %v463
    %v465 = vand.u32 2147483647, %v464
    %v467 = vcvt.s32.f32 %v460
    %v468 = vmul.f32 %v467, %v465
    %v469 = vxor.u32 %v468, 2147483648
    %v470 = vsel %vm349, %v469, %v468
    %v471 = vsub.s32 4, %v447
    %v472 = vsel %vm349, %v471, %v447
    %v473 = vsel %vm348, %v346, %v470
    %v474 = vsel %vm348, 0, %v472
    %v475 = vmul.f32 %v473, %v473
    %v476 = vmul.f32 %v475, -0.001358992
    %v477 = vadd.f32 %v476, 0.041655596
    %v478 = vmul.f32 %v475, %v477
    %v479 = vadd.f32 %v478, -0.4999988
    %v480 = vmul.f32 %v475, %v479
    %v481 = vadd.f32 1.0, %v480
    %v482 = vmul.f32 %v473, %v473
    %v483 = vmul.f32 %v482, -0.00019511016
    %v484 = vadd.f32 %v483, 0.008332121
    %v485 = vmul.f32 %v482, %v484
    %v486 = vadd.f32 %v485, -0.16666654
    %v487 = vmul.f32 %v482, %v486
    %v488 = vadd.f32 %v487, 1.0
    %v489 = vmul.f32 %v488, %v473
    %vm490 = vweird.f32 %v346
    %v491 = vand.u32 %v474, 3
    %vm492 = vcmp.lt.s32.totalorder %v491, 2
    %vm493 = vcmp.eq.s32.totalorder %v491, 0
    %v494 = vxor.u32 %v489, 2147483648
    %v495 = vsel %vm493, %v481, %v494
    %vm496 = vcmp.eq.s32.totalorder %v491, 2
    %v497 = vxor.u32 %v481, 2147483648
    %v498 = vsel %vm496, %v497, %v489
    %v499 = vsel %vm492, %v495, %v498
    %v500 = vsel %vm490, nan, %v499
    %v501 = vand.u32 2147483647, %v346
    %vm502 = vcmp.le.f32.partialorder %v501, 0.7853982
    %vm503 = vcmp.lt.s32.totalorder %v346, 0
    %v504 = vand.u32 %v346, 2139095040
    %v505 = vshrl.u32 %v504, 23
    %v506 = vsub.s32 %v505, 127
    %v507 = vand.u32 2147483647, %v346
    %v508 = vand.u32 %v507, 8388607
    %v509 = vor.u32 %v508, 8388608
    %v510 = vsub.s32 0, %v509
    %v511 = vadd.s32 %v506, 1
    %vm512 = vcmp.gt.s32.totalorder %v511, 0
    %v513 = vsel %vm512, %v511, 0
    %v514 = vshrl.u32 %v513, 5
    %v515 = vand.u32 %v513, 31
    %v516 = vsub.s32 32, %v515
    %v517 = vshrl.u32 683565275, %v516
    %v518 = vshll.u32 683565275, %v515
    %v519 = vshrl.u32 2475754826, %v516
    %v520 = vor.u32 %v518, %v519
    %v521 = vshll.u32 2475754826, %v515
    %v522 = vshrl.u32 2131351028, %v516
    %v523 = vor.u32 %v521, %v522
    %v524 = vshll.u32 2131351028, %v515
    %v525 = vshrl.u32 2102212464, %v516
    %v526 = vor.u32 %v524, %v525
    %v527 = vshll.u32 2102212464, %v515
    %v528 = vshrl.u32 920167782, %v516
    %v529 = vor.u32 %v527, %v528
    %v530 = vshll.u32 920167782, %v515
    %v531 = vshrl.u32 1326507024, %v516
    %v532 = vor.u32 %v530, %v531
    %vm533 = vcmp.lt.s32.totalorder %v514, 1
    %vm534 = vcmp.lt.s32.totalorder %v514, 2
    %vm535 = vcmp.lt.s32.totalorder %v514, 3
    %vm536 = vcmp.lt.s32.totalorder %v514, 4
    %v537 = vsel %vm533, %v517, %v520
    %v538 = vsel %vm536, %v526, 2102212464
    %v539 = vsel %vm535, %v523, %v538
    %v540 = vsel %vm534, %v537, %v539
    %v541 = vsel %vm533, %v520, %v523
    %v542 = vsel %vm536, %v529, 920167782
    %v543 = vsel %vm535, %v526, %v542
    %v544 = vsel %vm534, %v541, %v543
    %v545 = vsel %vm533, %v523, %v526
    %v546 = vsel %vm536, %v532, 1326507024
    %v547 = vsel %vm535, %v529, %v546
    %v548 = vsel %vm534, %v545, %v547
    %v549 = vshll.u32 %v509, 8
    %v550 = vand.u32 %v549, 65535
    %v551 = vshrl.u32 %v549, 16
    %v552 = vand.u32 %v548, 65535
    %v553 = vshrl.u32 %v548, 16
    %v554 = vmul.u32 %v550, %v552
    %v555 = vmul.u32 %v550, %v553
    %v556 = vmul.u32 %v551, %v552
    %v557 = vmul.u32 %v551, %v553
    %v558 = vshll.u32 %v555, 16
    %v559 = vshrl.u32 %v555, 16
    %v560 = vshll.u32 %v556, 16
    %v561 = vshrl.u32 %v556, 16
    %vm562 = vc.u32 %v554, %v558
    %v563 = vsel %vm562, 1, 0
    %v564 = vadd.s32 %v554, %v558
    %v565 = vadd.s32 %v557, %v563
    %vm566 = vc.u32 %v564, %v560
    %v567 = vsel %vm566, 1, 0
    %v568 = vadd.s32 %v564, %v560
    %v569 = vadd.s32 %v565, %v567
    %v570 = vadd.s32 %v569, %v559
    %v571 = vadd.s32 %v570, %v561
    %v572 = vand.u32 %v549, 65535
    %v573 = vshrl.u32 %v549, 16
    %v574 = vand.u32 %v544, 65535
    %v575 = vshrl.u32 %v544, 16
    %v576 = vmul.u32 %v572, %v574
    %v577 = vmul.u32 %v572, %v575
    %v578 = vmul.u32 %v573, %v574
    %v579 = vmul.u32 %v573, %v575
    %v580 = vshll.u32 %v577, 16
    %v581 = vshrl.u32 %v577, 16
    %v582 = vshll.u32 %v578, 16
    %v583 = vshrl.u32 %v578, 16
    %vm584 = vc.u32 %v576, %v580
    %v585 = vsel %vm584, 1, 0
    %v586 = vadd.s32 %v576, %v580
    %v587 = vadd.s32 %v579, %v585
    %vm588 = vc.u32 %v586, %v582
    %v589 = vsel %vm588, 1, 0
    %v590 = vadd.s32 %v586, %v582
    %v591 = vadd.s32 %v587, %v589
    %v592 = vadd.s32 %v591, %v581
    %v593 = vadd.s32 %v592, %v583
    %v594 = vmul.u32 %v549, %v540
    %v595 = vadd.s32 %v571, %v590
    %vm596 = vc.u32 %v571, %v590
    %v597 = vadd.s32 %v593, 1
    %v598 = vsel %vm596, %v597, %v593
    %v599 = vadd.s32 %v594, %v598
    %v600 = vadd.s32 %v599, 536870912
    %v601 = vshrl.u32 %v600, 30
    %v602 = vshll.u32 %v601, 30
    %v603 = vsub.s32 %v599, %v602
    %vm604 = vcmp.lt.s32.totalorder %v603, 0
    %v605 = vsub.s32 0, %v603
    %v606 = vsel %vm604, %v605, %v603
    %v607 = vclz %v606
    %v608 = vsub.s32 %v607, 2
    %vm609 = vcmp.gt.s32.totalorder 0, %v608
    %v610 = vsel %vm609, 0, %v608
    %v611 = vsub.s32 32, %v610
    %v612 = vshll.u32 %v603, %v610
    %v613 = vshrl.u32 %v595, %v611
    %v614 = vor.u32 %v612, %v613
    %v615 = vsub.s32 4294967266, %v610
    %v616 = vadd.s32 %v615, 127
    %v617 = vshll.u32 %v616, 23
    %v618 = vor.u32 4788187, %v617
    %v619 = vand.u32 2147483647, %v618
    %v621 = vcvt.s32.f32 %v614
    %v622 = vmul.f32 %v621, %v619
    %v623 = vxor.u32 %v622, 2147483648
    %v624 = vsel %vm503, %v623, %v622
    %v625 = vsub.s32 4, %v601
    %v626 = vsel %vm503, %v625, %v601
    %v627 = vsel %vm502, %v346, %v624
    %v628 = vsel %vm502, 0, %v626
    %v629 = vmul.f32 %v627, %v627
    %v630 = vmul.f32 %v629, -0.001358992
    %v631 = vadd.f32 %v630, 0.041655596
    %v632 = vmul.f32 %v629, %v631
    %v633 = vadd.f32 %v632, -0.4999988
    %v634 = vmul.f32 %v629, %v633
    %v635 = vadd.f32 1.0, %v634
    %v636 = vmul.f32 %v627, %v627
    %v637 = vmul.f32 %v636, -0.00019511016
    %v638 = vadd.f32 %v637, 0.008332121
    %v639 = vmul.f32 %v636, %v638
    %v640 = vadd.f32 %v639, -0.16666654
    %v641 = vmul.f32 %v636, %v640
    %v642 = vadd.f32 %v641, 1.0
    %v643 = vmul.f32 %v642, %v627
    %vm644 = vweird.f32 %v346
    %v645 = vadd.s32 %v628, 3
    %v646 = vand.u32 %v645, 3
    %vm647 = vcmp.lt.s32.totalorder %v646, 2
    %vm648 = vcmp.eq.s32.totalorder %v646, 0
    %v649 = vxor.u32 %v643, 2147483648
    %v650 = vsel %vm648, %v635, %v649
    %vm651 = vcmp.eq.s32.totalorder %v646, 2
    %v652 = vxor.u32 %v635, 2147483648
    %v653 = vsel %vm651, %v652, %v643
    %v654 = vsel %vm647, %v650, %v653
    %v655 = vsel %vm644, nan, %v654
    %v656 = vmul.f32 %v35, 0.5
    %v657 = vand.u32 2147483647, %v656
    %vm658 = vcmp.le.f32.partialorder %v657, 0.7853982
    %vm659 = vcmp.lt.s32.totalorder %v656, 0
    %v660 = vand.u32 %v656, 2139095040
    %v661 = vshrl.u32 %v660, 23
    %v662 = vsub.s32 %v661, 127
    %v663 = vand.u32 2147483647, %v656
    %v664 = vand.u32 %v663, 8388607
    %v665 = vor.u32 %v664, 8388608
    %v666 = vsub.s32 0, %v665
    %v667 = vadd.s32 %v662, 1
    %vm668 = vcmp.gt.s32.totalorder %v667, 0
    %v669 = vsel %vm668, %v667, 0
    %v670 = vshrl.u32 %v669, 5
    %v671 = vand.u32 %v669, 31
    %v672 = vsub.s32 32, %v671
    %v673 = vshrl.u32 683565275, %v672
    %v674 = vshll.u32 683565275, %v671
    %v675 = vshrl.u32 2475754826, %v672
    %v676 = vor.u32 %v674, %v675
    %v677 = vshll.u32 2475754826, %v671
    %v678 = vshrl.u32 2131351028, %v672
    %v679 = vor.u32 %v677, %v678
    %v680 = vshll.u32 2131351028, %v671
    %v681 = vshrl.u32 2102212464, %v672
    %v682 = vor.u32 %v680, %v681
    %v683 = vshll.u32 2102212464, %v671
    %v684 = vshrl.u32 920167782, %v672
    %v685 = vor.u32 %v683, %v684
    %v686 = vshll.u32 920167782, %v671
    %v687 = vshrl.u32 1326507024, %v672
    %v688 = vor.u32 %v686, %v687
    %vm689 = vcmp.lt.s32.totalorder %v670, 1
    %vm690 = vcmp.lt.s32.totalorder %v670, 2
    %vm691 = vcmp.lt.s32.totalorder %v670, 3
    %vm692 = vcmp.lt.s32.totalorder %v670, 4
    %v693 = vsel %vm689, %v673, %v676
    %v694 = vsel %vm692, %v682, 2102212464
    %v695 = vsel %vm691, %v679, %v694
    %v696 = vsel %vm690, %v693, %v695
    %v697 = vsel %vm689, %v676, %v679
    %v698 = vsel %vm692, %v685, 920167782
    %v699 = vsel %vm691, %v682, %v698
    %v700 = vsel %vm690, %v697, %v699
    %v701 = vsel %vm689, %v679, %v682
    %v702 = vsel %vm692, %v688, 1326507024
    %v703 = vsel %vm691, %v685, %v702
    %v704 = vsel %vm690, %v701, %v703
    %v705 = vshll.u32 %v665, 8
    %v706 = vand.u32 %v705, 65535
    %v707 = vshrl.u32 %v705, 16
    %v708 = vand.u32 %v704, 65535
    %v709 = vshrl.u32 %v704, 16
    %v710 = vmul.u32 %v706, %v708
    %v711 = vmul.u32 %v706, %v709
    %v712 = vmul.u32 %v707, %v708
    %v713 = vmul.u32 %v707, %v709
    %v714 = vshll.u32 %v711, 16
    %v715 = vshrl.u32 %v711, 16
    %v716 = vshll.u32 %v712, 16
    %v717 = vshrl.u32 %v712, 16
    %vm718 = vc.u32 %v710, %v714
    %v719 = vsel %vm718, 1, 0
    %v720 = vadd.s32 %v710, %v714
    %v721 = vadd.s32 %v713, %v719
    %vm722 = vc.u32 %v720, %v716
    %v723 = vsel %vm722, 1, 0
    %v724 = vadd.s32 %v720, %v716
    %v725 = vadd.s32 %v721, %v723
    %v726 = vadd.s32 %v725, %v715
    %v727 = vadd.s32 %v726, %v717
    %v728 = vand.u32 %v705, 65535
    %v729 = vshrl.u32 %v705, 16
    %v730 = vand.u32 %v700, 65535
    %v731 = vshrl.u32 %v700, 16
    %v732 = vmul.u32 %v728, %v730
    %v733 = vmul.u32 %v728, %v731
    %v734 = vmul.u32 %v729, %v730
    %v735 = vmul.u32 %v729, %v731
    %v736 = vshll.u32 %v733, 16
    %v737 = vshrl.u32 %v733, 16
    %v738 = vshll.u32 %v734, 16
    %v739 = vshrl.u32 %v734, 16
    %vm740 = vc.u32 %v732, %v736
    %v741 = vsel %vm740, 1, 0
    %v742 = vadd.s32 %v732, %v736
    %v743 = vadd.s32 %v735, %v741
    %vm744 = vc.u32 %v742, %v738
    %v745 = vsel %vm744, 1, 0
    %v746 = vadd.s32 %v742, %v738
    %v747 = vadd.s32 %v743, %v745
    %v748 = vadd.s32 %v747, %v737
    %v749 = vadd.s32 %v748, %v739
    %v750 = vmul.u32 %v705, %v696
    %v751 = vadd.s32 %v727, %v746
    %vm752 = vc.u32 %v727, %v746
    %v753 = vadd.s32 %v749, 1
    %v754 = vsel %vm752, %v753, %v749
    %v755 = vadd.s32 %v750, %v754
    %v756 = vadd.s32 %v755, 536870912
    %v757 = vshrl.u32 %v756, 30
    %v758 = vshll.u32 %v757, 30
    %v759 = vsub.s32 %v755, %v758
    %vm760 = vcmp.lt.s32.totalorder %v759, 0
    %v761 = vsub.s32 0, %v759
    %v762 = vsel %vm760, %v761, %v759
    %v763 = vclz %v762
    %v764 = vsub.s32 %v763, 2
    %vm765 = vcmp.gt.s32.totalorder 0, %v764
    %v766 = vsel %vm765, 0, %v764
    %v767 = vsub.s32 32, %v766
    %v768 = vshll.u32 %v759, %v766
    %v769 = vshrl.u32 %v751, %v767
    %v770 = vor.u32 %v768, %v769
    %v771 = vsub.s32 4294967266, %v766
    %v772 = vadd.s32 %v771, 127
    %v773 = vshll.u32 %v772, 23
    %v774 = vor.u32 4788187, %v773
    %v775 = vand.u32 2147483647, %v774
    %v777 = vcvt.s32.f32 %v770
    %v778 = vmul.f32 %v777, %v775
    %v779 = vxor.u32 %v778, 2147483648
    %v780 = vsel %vm659, %v779, %v778
    %v781 = vsub.s32 4, %v757
    %v782 = vsel %vm659, %v781, %v757
    %v783 = vsel %vm658, %v656, %v780
    %v784 = vsel %vm658, 0, %v782
    %v785 = vmul.f32 %v783, %v783
    %v786 = vmul.f32 %v785, -0.001358992
    %v787 = vadd.f32 %v786, 0.041655596
    %v788 = vmul.f32 %v785, %v787
    %v789 = vadd.f32 %v788, -0.4999988
    %v790 = vmul.f32 %v785, %v789
    %v791 = vadd.f32 1.0, %v790
    %v792 = vmul.f32 %v783, %v783
    %v793 = vmul.f32 %v792, -0.00019511016
    %v794 = vadd.f32 %v793, 0.008332121
    %v795 = vmul.f32 %v792, %v794
    %v796 = vadd.f32 %v795, -0.16666654
    %v797 = vmul.f32 %v792, %v796
    %v798 = vadd.f32 %v797, 1.0
    %v799 = vmul.f32 %v798, %v783
    %vm800 = vweird.f32 %v656
    %v801 = vand.u32 %v784, 3
    %vm802 = vcmp.lt.s32.totalorder %v801, 2
    %vm803 = vcmp.eq.s32.totalorder %v801, 0
    %v804 = vxor.u32 %v799, 2147483648
    %v805 = vsel %vm803, %v791, %v804
    %vm806 = vcmp.eq.s32.totalorder %v801, 2
    %v807 = vxor.u32 %v791, 2147483648
    %v808 = vsel %vm806, %v807, %v799
    %v809 = vsel %vm802, %v805, %v808
    %v810 = vsel %vm800, nan, %v809
    %v811 = vand.u32 2147483647, %v656
    %vm812 = vcmp.le.f32.partialorder %v811, 0.7853982
    %vm813 = vcmp.lt.s32.totalorder %v656, 0
    %v814 = vand.u32 %v656, 2139095040
    %v815 = vshrl.u32 %v814, 23
    %v816 = vsub.s32 %v815, 127
    %v817 = vand.u32 2147483647, %v656
    %v818 = vand.u32 %v817, 8388607
    %v819 = vor.u32 %v818, 8388608
    %v820 = vsub.s32 0, %v819
    %v821 = vadd.s32 %v816, 1
    %vm822 = vcmp.gt.s32.totalorder %v821, 0
    %v823 = vsel %vm822, %v821, 0
    %v824 = vshrl.u32 %v823, 5
    %v825 = vand.u32 %v823, 31
    %v826 = vsub.s32 32, %v825
    %v827 = vshrl.u32 683565275, %v826
    %v828 = vshll.u32 683565275, %v825
    %v829 = vshrl.u32 2475754826, %v826
    %v830 = vor.u32 %v828, %v829
    %v831 = vshll.u32 2475754826, %v825
    %v832 = vshrl.u32 2131351028, %v826
    %v833 = vor.u32 %v831, %v832
    %v834 = vshll.u32 2131351028, %v825
    %v835 = vshrl.u32 2102212464, %v826
    %v836 = vor.u32 %v834, %v835
    %v837 = vshll.u32 2102212464, %v825
    %v838 = vshrl.u32 920167782, %v826
    %v839 = vor.u32 %v837, %v838
    %v840 = vshll.u32 920167782, %v825
    %v841 = vshrl.u32 1326507024, %v826
    %v842 = vor.u32 %v840, %v841
    %vm843 = vcmp.lt.s32.totalorder %v824, 1
    %vm844 = vcmp.lt.s32.totalorder %v824, 2
    %vm845 = vcmp.lt.s32.totalorder %v824, 3
    %vm846 = vcmp.lt.s32.totalorder %v824, 4
    %v847 = vsel %vm843, %v827, %v830
    %v848 = vsel %vm846, %v836, 2102212464
    %v849 = vsel %vm845, %v833, %v848
    %v850 = vsel %vm844, %v847, %v849
    %v851 = vsel %vm843, %v830, %v833
    %v852 = vsel %vm846, %v839, 920167782
    %v853 = vsel %vm845, %v836, %v852
    %v854 = vsel %vm844, %v851, %v853
    %v855 = vsel %vm843, %v833, %v836
    %v856 = vsel %vm846, %v842, 1326507024
    %v857 = vsel %vm845, %v839, %v856
    %v858 = vsel %vm844, %v855, %v857
    %v859 = vshll.u32 %v819, 8
    %v860 = vand.u32 %v859, 65535
    %v861 = vshrl.u32 %v859, 16
    %v862 = vand.u32 %v858, 65535
    %v863 = vshrl.u32 %v858, 16
    %v864 = vmul.u32 %v860, %v862
    %v865 = vmul.u32 %v860, %v863
    %v866 = vmul.u32 %v861, %v862
    %v867 = vmul.u32 %v861, %v863
    %v868 = vshll.u32 %v865, 16
    %v869 = vshrl.u32 %v865, 16
    %v870 = vshll.u32 %v866, 16
    %v871 = vshrl.u32 %v866, 16
    %vm872 = vc.u32 %v864, %v868
    %v873 = vsel %vm872, 1, 0
    %v874 = vadd.s32 %v864, %v868
    %v875 = vadd.s32 %v867, %v873
    %vm876 = vc.u32 %v874, %v870
    %v877 = vsel %vm876, 1, 0
    %v878 = vadd.s32 %v874, %v870
    %v879 = vadd.s32 %v875, %v877
    %v880 = vadd.s32 %v879, %v869
    %v881 = vadd.s32 %v880, %v871
    %v882 = vand.u32 %v859, 65535
    %v883 = vshrl.u32 %v859, 16
    %v884 = vand.u32 %v854, 65535
    %v885 = vshrl.u32 %v854, 16
    %v886 = vmul.u32 %v882, %v884
    %v887 = vmul.u32 %v882, %v885
    %v888 = vmul.u32 %v883, %v884
    %v889 = vmul.u32 %v883, %v885
    %v890 = vshll.u32 %v887, 16
    %v891 = vshrl.u32 %v887, 16
    %v892 = vshll.u32 %v888, 16
    %v893 = vshrl.u32 %v888, 16
    %vm894 = vc.u32 %v886, %v890
    %v895 = vsel %vm894, 1, 0
    %v896 = vadd.s32 %v886, %v890
    %v897 = vadd.s32 %v889, %v895
    %vm898 = vc.u32 %v896, %v892
    %v899 = vsel %vm898, 1, 0
    %v900 = vadd.s32 %v896, %v892
    %v901 = vadd.s32 %v897, %v899
    %v902 = vadd.s32 %v901, %v891
    %v903 = vadd.s32 %v902, %v893
    %v904 = vmul.u32 %v859, %v850
    %v905 = vadd.s32 %v881, %v900
    %vm906 = vc.u32 %v881, %v900
    %v907 = vadd.s32 %v903, 1
    %v908 = vsel %vm906, %v907, %v903
    %v909 = vadd.s32 %v904, %v908
    %v910 = vadd.s32 %v909, 536870912
    %v911 = vshrl.u32 %v910, 30
    %v912 = vshll.u32 %v911, 30
    %v913 = vsub.s32 %v909, %v912
    %vm914 = vcmp.lt.s32.totalorder %v913, 0
    %v915 = vsub.s32 0, %v913
    %v916 = vsel %vm914, %v915, %v913
    %v917 = vclz %v916
    %v918 = vsub.s32 %v917, 2
    %vm919 = vcmp.gt.s32.totalorder 0, %v918
    %v920 = vsel %vm919, 0, %v918
    %v921 = vsub.s32 32, %v920
    %v922 = vshll.u32 %v913, %v920
    %v923 = vshrl.u32 %v905, %v921
    %v924 = vor.u32 %v922, %v923
    %v925 = vsub.s32 4294967266, %v920
    %v926 = vadd.s32 %v925, 127
    %v927 = vshll.u32 %v926, 23
    %v928 = vor.u32 4788187, %v927
    %v929 = vand.u32 2147483647, %v928
    %v931 = vcvt.s32.f32 %v924
    %v932 = vmul.f32 %v931, %v929
    %v933 = vxor.u32 %v932, 2147483648
    %v934 = vsel %vm813, %v933, %v932
    %v935 = vsub.s32 4, %v911
    %v936 = vsel %vm813, %v935, %v911
    %v937 = vsel %vm812, %v656, %v934
    %v938 = vsel %vm812, 0, %v936
    %v939 = vmul.f32 %v937, %v937
    %v940 = vmul.f32 %v939, -0.001358992
    %v941 = vadd.f32 %v940, 0.041655596
    %v942 = vmul.f32 %v939, %v941
    %v943 = vadd.f32 %v942, -0.4999988
    %v944 = vmul.f32 %v939, %v943
    %v945 = vadd.f32 1.0, %v944
    %v946 = vmul.f32 %v937, %v937
    %v947 = vmul.f32 %v946, -0.00019511016
    %v948 = vadd.f32 %v947, 0.008332121
    %v949 = vmul.f32 %v946, %v948
    %v950 = vadd.f32 %v949, -0.16666654
    %v951 = vmul.f32 %v946, %v950
    %v952 = vadd.f32 %v951, 1.0
    %v953 = vmul.f32 %v952, %v937
    %vm954 = vweird.f32 %v656
    %v955 = vadd.s32 %v938, 3
    %v956 = vand.u32 %v955, 3
    %vm957 = vcmp.lt.s32.totalorder %v956, 2
    %vm958 = vcmp.eq.s32.totalorder %v956, 0
    %v959 = vxor.u32 %v953, 2147483648
    %v960 = vsel %vm958, %v945, %v959
    %vm961 = vcmp.eq.s32.totalorder %v956, 2
    %v962 = vxor.u32 %v945, 2147483648
    %v963 = vsel %vm961, %v962, %v953
    %v964 = vsel %vm957, %v960, %v963
    %v965 = vsel %vm954, nan, %v964
    %v966 = vmul.f32 %v500, %v190
    %v967 = vmul.f32 %v655, %v190
    %v968 = vmul.f32 %v500, %v345
    %v969 = vmul.f32 %v655, %v345
    %v970 = vmul.f32 %v25, 0.05
    %v971 = vadd.f32 %v970, 1.0
    %972 = vst [vmem:[#allocation5] sm:$0x1] %v971
    %s973 = scalar_lea.vmem [#allocation2], 1
    %v974 = vld [vmem:[%s973] sm:$0x1]
    %s975 = scalar_lea.vmem [#allocation5], 1
    %976 = vst [vmem:[%s975] sm:$0x1] %v974
    %s977 = scalar_lea.vmem [#allocation2], 2
    %v978 = vld [vmem:[%s977] sm:$0x1]
    %s979 = scalar_lea.vmem [#allocation5], 2
    %980 = vst [vmem:[%s979] sm:$0x1] %v978
    %v981 = vmul.f32 %v810, %v966
    %v982 = vmul.f32 %v965, %v969
    %v983 = vsub.f32 %v981, %v982
    %s984 = scalar_lea.vmem [#allocation5], 3
    %985 = vst [vmem:[%s984] sm:$0x1] %v983
    %v986 = vmul.f32 %v810, %v967
    %v987 = vmul.f32 %v965, %v968
    %v988 = vsub.f32 %v986, %v987
    %s989 = scalar_lea.vmem [#allocation5], 4
    %990 = vst [vmem:[%s989] sm:$0x1] %v988
    %v991 = vmul.f32 %v810, %v968
    %v992 = vmul.f32 %v965, %v967
    %v993 = vadd.f32 %v991, %v992
    %s994 = scalar_lea.vmem [#allocation5], 5
    %995 = vst [vmem:[%s994] sm:$0x1] %v993
    %v996 = vmul.f32 %v810, %v969
    %v997 = vmul.f32 %v965, %v966
    %v998 = vadd.f32 %v996, %v997
    %s999 = scalar_lea.vmem [#allocation5], 6
    %1000 = vst [vmem:[%s999] sm:$0x1] %v998
    // Predicated region
    $region10: #{tpu_custom_call.1} parent=1 // pred_check
      _
    $region11: #{tpu_custom_call.1} parent=1 // pred_check_branch
      %1002 = sbr.rel (0) target = $region13
    $region12: #{tpu_custom_call.1} parent=1 // pred_region
      %1004 = vsyncadd [#allocation4], 0
      %s1005 = sshll.u32 [#allocation5], 4
      %s1006 = int_to_ptr.vmem [resolvable:$true] %s1005
      %s1007 = sshll.u32 %s1, 4
      %s1008 = int_to_ptr.hbm [resolvable:$true] %s1007
      %1013 = dma.vmem_to_hbm [thread:$0]  %s1006, 112, %s1008, [#allocation4], 16, 16, 1
    $region13: #{tpu_custom_call.1} parent=1 // pred_fallthru
      _
    // Predicated region
    $region14: #{tpu_custom_call.1} parent=1 // pred_check
      _
    $region15: #{tpu_custom_call.1} parent=1 // pred_check_branch
      %1015 = sbr.rel (0) target = $region17
    $region16: #{tpu_custom_call.1} parent=1 // pred_region
      %1017 = dma.done [#allocation4], 112
    $region17: #{tpu_custom_call.1} parent=1 // pred_fallthru
      _
    %1018 = vsyncpa [#allocation3], 1
    %1019 = vsyncpa [#allocation4], 1

</llo_original>
